<compile_context>
chip_gen: v6e
topology: v6e:2x2x1
jax: 0.10.0
libtpu: 0.0.40
codegen_flags: <defaults>
</compile_context>

<pallas_src>
import functools

import jax
import jax.numpy as jnp
from jax import lax
from jax.experimental import pallas as pl
from jax.experimental.pallas import tpu as pltpu


# ---- hyper-parameters of the module (match the PyTorch __init__ defaults) ----
LABEL_SMOOTHING = 0.1
T1 = 0.2
T2 = 1.2
NUM_ITERS = 5
REDUCTION = "mean"


def _round_up(x, m):
    return ((x + m - 1) // m) * m


def _bitempered_kernel(acts_ref, labels_ref, out_ref, *, t1, t2,
                       label_smoothing, num_iters):
    # Transposed tile: classes on sublanes, batch on the 128-wide lane axis.
    acts = acts_ref[...].astype(jnp.float32)          # (C, TB)
    labels = labels_ref[...]                           # (1, TB) int32
    nc, tb = acts.shape

    # ---- constant-folded per-class target terms -------------------------
    # With label smoothing the smoothed targets take only two scalar values:
    #   on  = 1 - ls             (labelled class)
    #   off = ls / (C - 1)       (all other classes)
    ncf = float(nc)
    if label_smoothing > 0.0:
        on_val = 1.0 - label_smoothing
        off_val = label_smoothing / (ncf - 1.0)
    else:
        on_val, off_val = 1.0, 0.0
    inv_1mt1 = 1.0 / (1.0 - t1)                        # 1.25
    inv_2mt1 = 1.0 / (2.0 - t1)                        # 1/1.8

    def _logt1_const(v):                               # log_t(v, t1) on floats
        return (v ** (1.0 - t1) - 1.0) * inv_1mt1

    def _tgt_const(v):
        # log_t(v+1e-10, t1)*v + v/(1-t1) - v^(2-t1)/(2-t1)
        return (_logt1_const(v + 1e-10) * v + v * inv_1mt1
                - (v ** (2.0 - t1)) * inv_2mt1)

    c_on = _tgt_const(on_val)
    c_off = _tgt_const(off_val)

    class_ids = lax.broadcasted_iota(jnp.int32, (nc, tb), 0)
    is_tgt = class_ids == labels                       # (C, TB) bool

    # ---- tempered softmax (t2 = 1.2  ->  1/(1-t2) == -5 exactly) ---------
    one_m_t2 = 1.0 - t2                                # -0.2

    def _pow5(x):
        x2 = x * x
        return (x2 * x2) * x

    mu = jnp.max(acts, axis=0, keepdims=True)          # (1, TB)
    s = one_m_t2 * (acts - mu)                         # pre-scaled, >= 0

    # Fixed-point normalizer.  Iteration 0 (zpow == 1) is peeled; the 4
    # remaining zpow updates run in a rolled fori_loop (iterations are
    # serially dependent, so rolling costs nothing and bounds VMEM live
    # ranges).  exp_t uses approx reciprocal (EUP) inside the fixed point.
    x5 = _pow5(jnp.maximum(1.0 + s, 0.0))
    z = jnp.sum(pl.reciprocal(x5, approx=True), axis=0, keepdims=True)
    zpow = jnp.power(z, one_m_t2)                      # (1, TB) per-row power

    def _iter(_, zp):
        x5 = _pow5(jnp.maximum(1.0 + s * zp, 0.0))
        z = jnp.sum(pl.reciprocal(x5, approx=True), axis=0, keepdims=True)
        return jnp.power(z, one_m_t2)

    zpow = lax.fori_loop(1, num_iters, _iter, zpow)

    # Final partition function, refined with one Newton step.
    x5 = _pow5(jnp.maximum(1.0 + s * zpow, 0.0))
    r = pl.reciprocal(x5, approx=True)
    r = r * (2.0 - x5 * r)
    z = jnp.sum(r, axis=0, keepdims=True)              # (1, TB)

    # probs = exp_t(acts - norm_const, t2) == relu(s + z^(t2-1)) ** (-5)
    xp = jnp.maximum(s + jnp.power(z, t2 - 1.0), 0.0)  # (C, TB), >= 1 here
    xp5 = _pow5(xp)
    probs = pl.reciprocal(xp5, approx=True)
    probs = probs * (2.0 - xp5 * probs)                # Newton-refined p = xp^-5
    q = probs * xp                                     # p^(1-t1) = xp^-4 (t1=0.2)

    # loss_el = c_sel + q * (p/(2-t1) - tgt/(1-t1))   (algebraic refactor)
    tgt = jnp.where(is_tgt, jnp.float32(on_val), jnp.float32(off_val))
    c_sel = jnp.where(is_tgt, jnp.float32(c_on), jnp.float32(c_off))
    loss_el = c_sel + q * (probs * inv_2mt1 - tgt * inv_1mt1)   # (C, TB)

    # Per-example loss -> lane-dense (1, TB) output block.
    out_ref[...] = jnp.sum(loss_el, axis=0, keepdims=True)


@functools.partial(jax.jit, static_argnames=("reduction", "tile_b"))
def bi_tempered_logistic_loss(activations, labels, reduction=REDUCTION,
                              tile_b=None):
    """activations: (B, C) float (any dtype); labels: (B,) int. Scalar f32 loss."""
    B, C = activations.shape

    if tile_b is None:
        # ~2 MiB f32 per (C, TB) tile: big enough to amortize the ~0.35 us
        # per-grid-step overhead, small enough that the ~6-8 live full-tile
        # temporaries + double-buffered inputs fit VMEM on every generation
        # (v7x: 64 MiB physical).
        target_elems = 1 << 19
        tile_b = (target_elems // max(C, 1)) // 128 * 128
    tile_b = max(128, (int(tile_b) // 128) * 128)      # lane-dense multiple of 128
    tile_b = min(tile_b, _round_up(B, 128))

    Bp = _round_up(B, tile_b)
    # Batch on the lane axis (classes on sublanes): transpose + pad in wrapper.
    acts_t = jnp.pad(activations, ((0, Bp - B), (0, 0))).T          # (C, Bp)
    labels_2d = jnp.pad(labels.astype(jnp.int32), ((0, Bp - B),)).reshape(1, Bp)

    kernel = functools.partial(
        _bitempered_kernel, t1=T1, t2=T2,
        label_smoothing=LABEL_SMOOTHING, num_iters=NUM_ITERS)

    per_ex = pl.pallas_call(
        kernel,
        out_shape=jax.ShapeDtypeStruct((1, Bp), jnp.float32),
        grid=(Bp // tile_b,),
        in_specs=[
            # native dtype (no wrapper upcast) -> half the DMA bytes for bf16
            pl.BlockSpec((C, tile_b), lambda i: (0, i)),
            pl.BlockSpec((1, tile_b), lambda i: (0, i)),
        ],
        out_specs=pl.BlockSpec((1, tile_b), lambda i: (0, i)),
        compiler_params=pltpu.CompilerParams(
            # Each tile writes its own output block -> batch axis is parallel
            # (megacore sharding on v7x; neutral on v5e/v6e).
            dimension_semantics=("parallel",),
            vmem_limit_bytes=32 * 1024 * 1024),
    )(acts_t, labels_2d)

    # Tiny final reduction in the wrapper (drops padded rows).
    loss = jnp.sum(per_ex[0, :B])
    if reduction == "mean":
        loss = loss / B
    return loss


# -------------------- pure-JAX reference (for sanity check) --------------------
def _exp_t_ref(u, t):
    return jnp.power(jnp.maximum(1.0 + (1.0 - t) * u, 0.0), 1.0 / (1.0 - t))


def _log_t_ref(u, t):
    return (jnp.power(u, 1.0 - t) - 1.0) / (1.0 - t)


def _reference(activations, labels):
    acts = activations.astype(jnp.float32)
    B, C = acts.shape
    targets = jax.nn.one_hot(labels, C, dtype=jnp.float32)
    ls = LABEL_SMOOTHING
    if ls > 0.0:
        targets = (1.0 - C / (C - 1.0) * ls) * targets + ls / (C - 1.0)

    mu = jnp.max(acts, axis=-1, keepdims=True)
    norm0 = acts - mu
    norm = norm0
    for _ in range(NUM_ITERS):
        part = jnp.sum(_exp_t_ref(norm, T2), axis=-1, keepdims=True)
        norm = norm0 * jnp.power(part, 1.0 - T2)
    part = jnp.sum(_exp_t_ref(norm, T2), axis=-1, keepdims=True)
    norm_const = -_log_t_ref(1.0 / part, T2) + mu
    probs = _exp_t_ref(acts - norm_const, T2)

    temp1 = (_log_t_ref(targets + 1e-10, T1) - _log_t_ref(probs, T1)) * targets
    temp2 = (jnp.power(targets, 2.0 - T1) - jnp.power(probs, 2.0 - T1)) / (2.0 - T1)
    loss_values = temp1 - temp2
    per_example = jnp.sum(loss_values, axis=-1)
    if REDUCTION == "mean":
        return jnp.mean(per_example)
    return jnp.sum(per_example)


if __name__ == "__main__":
    key = jax.random.PRNGKey(0)

    # Case 1: small batch (single tile, batch padded 20 -> 128 lanes).
    B1, C1 = 20, 32
    k1a, k1l, k2a, k2l = jax.random.split(key, 4)
    acts1 = jax.random.normal(k1a, (B1, C1), dtype=jnp.float32)
    lbls1 = jax.random.randint(k1l, (B1,), 0, C1, dtype=jnp.int32)
    loss1 = jax.block_until_ready(bi_tempered_logistic_loss(acts1, lbls1))
    ref1 = jax.block_until_ready(_reference(acts1, lbls1))
    assert jnp.allclose(loss1, ref1, rtol=1e-3, atol=1e-3), (loss1, ref1)

    # Case 2: multi-tile "parallel" grid (tile_b=128 -> grid of 3) + padding.
    B2, C2 = 300, 16
    acts2 = jax.random.normal(k2a, (B2, C2), dtype=jnp.float32)
    lbls2 = jax.random.randint(k2l, (B2,), 0, C2, dtype=jnp.int32)
    loss2 = jax.block_until_ready(
        bi_tempered_logistic_loss(acts2, lbls2, tile_b=128))
    ref2 = jax.block_until_ready(_reference(acts2, lbls2))
    assert jnp.allclose(loss2, ref2, rtol=1e-3, atol=1e-3), (loss2, ref2)

    print("KERNEL_OK")
</pallas_src>

<mosaic_0001>
module attributes {stable_mosaic.version = 11 : i64} {
  func.func @_bitempered_kernel(%arg0: i32, %arg1: memref<32x128xf32, #tpu.memory_space<vmem>>, %arg2: memref<1x128xi32, #tpu.memory_space<vmem>>, %arg3: memref<1x128xf32, #tpu.memory_space<vmem>>) attributes {dimension_semantics = [#tpu.dimension_semantics<parallel>], iteration_bounds = array<i64: 1>, scalar_prefetch = 0 : i64, scratch_operands = 0 : i64, tpu.core_type = #tpu.core_type<tc>, window_params = [{transform_indices = @transform_0, window_bounds = array<i64: 32, 128>}, {transform_indices = @transform_1, window_bounds = array<i64: 1, 128>}, {transform_indices = @transform_2, window_bounds = array<i64: 1, 128>}]} {
    %c0 = arith.constant 0 : index
    %c0_0 = arith.constant 0 : index
    %0 = vector.load %arg1[%c0, %c0_0] : memref<32x128xf32, #tpu.memory_space<vmem>>, vector<32x128xf32>
    %c0_1 = arith.constant 0 : index
    %c0_2 = arith.constant 0 : index
    %1 = vector.load %arg2[%c0_1, %c0_2] : memref<1x128xi32, #tpu.memory_space<vmem>>, vector<1x128xi32>
    %2 = tpu.iota {dimensions = array<i32: 0>} : vector<32x128xi32>
    %3 = vector.broadcast %1 : vector<1x128xi32> to vector<32x128xi32>
    %4 = arith.cmpi eq, %2, %3 : vector<32x128xi32>
    %cst = arith.constant dense<0xFF800000> : vector<128xf32>
    %5 = vector.multi_reduction <maximumf>, %0, %cst [0] : vector<32x128xf32> to vector<128xf32>
    %6 = vector.shape_cast %5 : vector<128xf32> to vector<1x128xf32>
    %7 = vector.broadcast %6 : vector<1x128xf32> to vector<32x128xf32>
    %8 = arith.subf %0, %7 : vector<32x128xf32>
    %cst_3 = arith.constant -2.000000e-01 : f32
    %9 = vector.broadcast %cst_3 : f32 to vector<32x128xf32>
    %10 = arith.mulf %9, %8 : vector<32x128xf32>
    %cst_4 = arith.constant 1.000000e+00 : f32
    %11 = vector.broadcast %cst_4 : f32 to vector<32x128xf32>
    %12 = arith.addf %11, %10 : vector<32x128xf32>
    %cst_5 = arith.constant 0.000000e+00 : f32
    %13 = vector.broadcast %cst_5 : f32 to vector<32x128xf32>
    %14 = arith.maximumf %12, %13 : vector<32x128xf32>
    %15 = arith.mulf %14, %14 : vector<32x128xf32>
    %16 = arith.mulf %15, %15 : vector<32x128xf32>
    %17 = arith.mulf %16, %14 : vector<32x128xf32>
    %18 = tpu.reciprocal %17 {approx = true} : vector<32x128xf32> -> vector<32x128xf32>
    %cst_6 = arith.constant dense<0.000000e+00> : vector<128xf32>
    %19 = vector.multi_reduction <add>, %18, %cst_6 [0] : vector<32x128xf32> to vector<128xf32>
    %20 = vector.shape_cast %19 : vector<128xf32> to vector<1x128xf32>
    %cst_7 = arith.constant -2.000000e-01 : f32
    %21 = vector.broadcast %cst_7 : f32 to vector<1x128xf32>
    %22 = math.powf %20, %21 : vector<1x128xf32>
    %c0_i32 = arith.constant 0 : i32
    %c4_i32 = arith.constant 4 : i32
    %23 = arith.addi %c0_i32, %c4_i32 : i32
    %c1_i32 = arith.constant 1 : i32
    %24 = scf.for %arg4 = %c0_i32 to %23 step %c1_i32 iter_args(%arg5 = %22) -> (vector<1x128xf32>)  : i32 {
      %72 = vector.broadcast %arg5 : vector<1x128xf32> to vector<32x128xf32>
      %73 = arith.mulf %10, %72 : vector<32x128xf32>
      %cst_24 = arith.constant 1.000000e+00 : f32
      %74 = vector.broadcast %cst_24 : f32 to vector<32x128xf32>
      %75 = arith.addf %74, %73 : vector<32x128xf32>
      %cst_25 = arith.constant 0.000000e+00 : f32
      %76 = vector.broadcast %cst_25 : f32 to vector<32x128xf32>
      %77 = arith.maximumf %75, %76 : vector<32x128xf32>
      %78 = arith.mulf %77, %77 : vector<32x128xf32>
      %79 = arith.mulf %78, %78 : vector<32x128xf32>
      %80 = arith.mulf %79, %77 : vector<32x128xf32>
      %81 = tpu.reciprocal %80 {approx = true} : vector<32x128xf32> -> vector<32x128xf32>
      %cst_26 = arith.constant dense<0.000000e+00> : vector<128xf32>
      %82 = vector.multi_reduction <add>, %81, %cst_26 [0] : vector<32x128xf32> to vector<128xf32>
      %83 = vector.shape_cast %82 : vector<128xf32> to vector<1x128xf32>
      %cst_27 = arith.constant -2.000000e-01 : f32
      %84 = vector.broadcast %cst_27 : f32 to vector<1x128xf32>
      %85 = math.powf %83, %84 : vector<1x128xf32>
      scf.yield %85 : vector<1x128xf32>
    }
    %25 = vector.broadcast %24 : vector<1x128xf32> to vector<32x128xf32>
    %26 = arith.mulf %10, %25 : vector<32x128xf32>
    %cst_8 = arith.constant 1.000000e+00 : f32
    %27 = vector.broadcast %cst_8 : f32 to vector<32x128xf32>
    %28 = arith.addf %27, %26 : vector<32x128xf32>
    %cst_9 = arith.constant 0.000000e+00 : f32
    %29 = vector.broadcast %cst_9 : f32 to vector<32x128xf32>
    %30 = arith.maximumf %28, %29 : vector<32x128xf32>
    %31 = arith.mulf %30, %30 : vector<32x128xf32>
    %32 = arith.mulf %31, %31 : vector<32x128xf32>
    %33 = arith.mulf %32, %30 : vector<32x128xf32>
    %34 = tpu.reciprocal %33 {approx = true} : vector<32x128xf32> -> vector<32x128xf32>
    %35 = arith.mulf %33, %34 : vector<32x128xf32>
    %cst_10 = arith.constant 2.000000e+00 : f32
    %36 = vector.broadcast %cst_10 : f32 to vector<32x128xf32>
    %37 = arith.subf %36, %35 : vector<32x128xf32>
    %38 = arith.mulf %34, %37 : vector<32x128xf32>
    %cst_11 = arith.constant dense<0.000000e+00> : vector<128xf32>
    %39 = vector.multi_reduction <add>, %38, %cst_11 [0] : vector<32x128xf32> to vector<128xf32>
    %40 = vector.shape_cast %39 : vector<128xf32> to vector<1x128xf32>
    %cst_12 = arith.constant 2.000000e-01 : f32
    %41 = vector.broadcast %cst_12 : f32 to vector<1x128xf32>
    %42 = math.powf %40, %41 : vector<1x128xf32>
    %43 = vector.broadcast %42 : vector<1x128xf32> to vector<32x128xf32>
    %44 = arith.addf %10, %43 : vector<32x128xf32>
    %cst_13 = arith.constant 0.000000e+00 : f32
    %45 = vector.broadcast %cst_13 : f32 to vector<32x128xf32>
    %46 = arith.maximumf %44, %45 : vector<32x128xf32>
    %47 = arith.mulf %46, %46 : vector<32x128xf32>
    %48 = arith.mulf %47, %47 : vector<32x128xf32>
    %49 = arith.mulf %48, %46 : vector<32x128xf32>
    %50 = tpu.reciprocal %49 {approx = true} : vector<32x128xf32> -> vector<32x128xf32>
    %51 = arith.mulf %49, %50 : vector<32x128xf32>
    %cst_14 = arith.constant 2.000000e+00 : f32
    %52 = vector.broadcast %cst_14 : f32 to vector<32x128xf32>
    %53 = arith.subf %52, %51 : vector<32x128xf32>
    %54 = arith.mulf %50, %53 : vector<32x128xf32>
    %55 = arith.mulf %54, %46 : vector<32x128xf32>
    %cst_15 = arith.constant 0.899999976 : f32
    %cst_16 = arith.constant 0.0032258064 : f32
    %56 = vector.broadcast %cst_15 : f32 to vector<32x128xf32>
    %57 = vector.broadcast %cst_16 : f32 to vector<32x128xf32>
    %58 = arith.select %4, %56, %57 : vector<32x128xi1>, vector<32x128xf32>
    %cst_17 = arith.constant 0.574478805 : f32
    %cst_18 = arith.constant 2.27607452E-5 : f32
    %59 = vector.broadcast %cst_17 : f32 to vector<32x128xf32>
    %60 = vector.broadcast %cst_18 : f32 to vector<32x128xf32>
    %61 = arith.select %4, %59, %60 : vector<32x128xi1>, vector<32x128xf32>
    %cst_19 = arith.constant 0.555555582 : f32
    %62 = vector.broadcast %cst_19 : f32 to vector<32x128xf32>
    %63 = arith.mulf %54, %62 : vector<32x128xf32>
    %cst_20 = arith.constant 1.250000e+00 : f32
    %64 = vector.broadcast %cst_20 : f32 to vector<32x128xf32>
    %65 = arith.mulf %58, %64 : vector<32x128xf32>
    %66 = arith.subf %63, %65 : vector<32x128xf32>
    %67 = arith.mulf %55, %66 : vector<32x128xf32>
    %68 = arith.addf %61, %67 : vector<32x128xf32>
    %cst_21 = arith.constant dense<0.000000e+00> : vector<128xf32>
    %69 = vector.multi_reduction <add>, %68, %cst_21 [0] : vector<32x128xf32> to vector<128xf32>
    %70 = vector.shape_cast %69 : vector<128xf32> to vector<1x128xf32>
    %c0_22 = arith.constant 0 : index
    %c0_23 = arith.constant 0 : index
    %71 = vector.load %arg3[%c0_22, %c0_23] : memref<1x128xf32, #tpu.memory_space<vmem>>, vector<1x128xf32>
    tpu.vector_store %arg3[%c0_22, %c0_23], %70 {strides = array<i32>} : memref<1x128xf32, #tpu.memory_space<vmem>>, vector<1x128xf32>,
    return
  }
  func.func @transform_0(%arg0: i32) -> (i32, i32) {
    %c0_i32 = arith.constant 0 : i32
    %c0_i32_0 = arith.constant 0 : i32
    return %c0_i32, %arg0 : i32, i32
  }
  func.func @transform_1(%arg0: i32) -> (i32, i32) {
    %c0_i32 = arith.constant 0 : i32
    %c0_i32_0 = arith.constant 0 : i32
    return %c0_i32, %arg0 : i32, i32
  }
  func.func @transform_2(%arg0: i32) -> (i32, i32) {
    %c0_i32 = arith.constant 0 : i32
    %c0_i32_0 = arith.constant 0 : i32
    return %c0_i32, %arg0 : i32, i32
  }
}

</mosaic_0001>

<llo_original>
// kernel: bi_tempered_logistic_loss.1
$region0: #{bi_tempered_logistic_loss.1}
  #allocation0 [shape = 'u32[]', space=smem, size = 0x4, offset = 0x4, fixed_abs, tag = 'smem constant byte address 0x4 - core index']
  #allocation1 [shape = 'u32[144,128]{1,0:T(1,128)}', space=vmem, size = 0x12000, scoped, tag = 'internal scratch']
  %s0 = inlined_call_operand.vmem [shape: f32[32,128], index: 0, kind: input, shape index: {}]
  %s1 = inlined_call_operand.vmem [shape: s32[1,128], index: 1, kind: input, shape index: {}]
  %s2 = inlined_call_operand.vmem [shape: f32[1,128], index: 2, kind: output, shape index: {}]
  %s3 = sld [smem:[#allocation0]]
  $region25: #{bi_tempered_logistic_loss.1} parent=0
    _
  %s5 = ssub.s32 1, %s3
  %s6 = scalar_select 0, %s5, %s3
  // Predicated region
  $region2: #{bi_tempered_logistic_loss.1} parent=0 // pred_check
    _
  $region3: #{bi_tempered_logistic_loss.1} parent=0 // pred_check_branch
    %8 = sbr.rel (0) target = $region5
  $region4: #{bi_tempered_logistic_loss.1} parent=0 // pred_region
    _
  $region5: #{bi_tempered_logistic_loss.1} parent=0 // pred_fallthru
    _
  // Predicated region
  $region6: #{bi_tempered_logistic_loss.1} parent=0 // pred_check
    _
  $region7: #{bi_tempered_logistic_loss.1} parent=0 // pred_check_branch
    %10 = sbr.rel (0) target = $region9
  $region8: #{bi_tempered_logistic_loss.1} parent=0 // pred_region
    _
  $region9: #{bi_tempered_logistic_loss.1} parent=0 // pred_fallthru
    _
  %v11 = vld [vmem:[%s0] sm:$0xff]
  %v12 = vld [vmem:[%s0 + $0x8] sm:$0xff]
  %v13 = vld [vmem:[%s0 + $0x10] sm:$0xff]
  %v14 = vld [vmem:[%s0 + $0x18] sm:$0xff]
  %v15 = vld [vmem:[%s1] sm:$0x1]
  %v16 = vlaneseq
  %v17 = vshrl.u32 %v16, 7
  %v18 = vadd.s32 %v17, 8
  %v19 = vadd.s32 %v17, 16
  %v20 = vadd.s32 %v17, 24
  %v21 = vlaneseq
  %v22 = vshrl.u32 %v21, 7
  %v23 = vsub.s32 0, %v22
  %v24 = vrot.slane %v15, %v23
  %vm25 = vcmp.eq.s32.totalorder %v17, %v24
  %vm26 = vcmp.eq.s32.totalorder %v18, %v24
  %vm27 = vcmp.eq.s32.totalorder %v19, %v24
  %vm28 = vcmp.eq.s32.totalorder %v20, %v24
  %v29 = vmax.f32 %v11, %v12
  %v30 = vmax.f32 %v13, %v14
  %v31 = vmax.f32 %v29, %v30
  %v32 = vrot.slane %v31, 4
  %v33 = vmax.f32 %v31, %v32
  %v34 = vrot.slane %v33, 2
  %v35 = vmax.f32 %v33, %v34
  %v36 = vrot.slane %v35, 1
  %v37 = vmax.f32 %v35, %v36
  %v38 = vsub.f32 %v11, %v37
  %v39 = vsub.f32 %v12, %v37
  %v40 = vsub.f32 %v13, %v37
  %v41 = vsub.f32 %v14, %v37
  %v42 = vmul.f32 %v38, -0.2
  %v43 = vmul.f32 %v39, -0.2
  %v44 = vmul.f32 %v40, -0.2
  %v45 = vmul.f32 %v41, -0.2
  %v46 = vadd.f32 %v42, 1.0
  %v47 = vadd.f32 %v43, 1.0
  %v48 = vadd.f32 %v44, 1.0
  %v49 = vadd.f32 %v45, 1.0
  %v50 = vmax.f32 %v46, 0.0
  %v51 = vmax.f32 %v47, 0.0
  %v52 = vmax.f32 %v48, 0.0
  %v53 = vmax.f32 %v49, 0.0
  %v54 = vmul.f32 %v50, %v50
  %v55 = vmul.f32 %v51, %v51
  %v56 = vmul.f32 %v52, %v52
  %v57 = vmul.f32 %v53, %v53
  %v58 = vmul.f32 %v54, %v54
  %v59 = vmul.f32 %v55, %v55
  %v60 = vmul.f32 %v56, %v56
  %v61 = vmul.f32 %v57, %v57
  %v62 = vmul.f32 %v58, %v50
  %v63 = vmul.f32 %v59, %v51
  %v64 = vmul.f32 %v60, %v52
  %v65 = vmul.f32 %v61, %v53
  %v66 = vrcp.pop %v62
  %v67 = vrcp.pop %v63
  %v68 = vrcp.pop %v64
  %v69 = vrcp.pop %v65
  %v70 = vadd.f32 %v66, %v67
  %v71 = vadd.f32 %v70, %v68
  %v72 = vadd.f32 %v71, %v69
  %v73 = vrot.slane %v72, 4
  %v74 = vadd.f32 %v72, %v73
  %v75 = vrot.slane %v74, 2
  %v76 = vadd.f32 %v74, %v75
  %v77 = vrot.slane %v76, 1
  %v78 = vadd.f32 %v76, %v77
  %v79 = vpow.f32 %v78, -0.2
  loop: start=0, step=1, limit=4
  $region10: #{bi_tempered_logistic_loss.1} parent=0 // loop_pre_header
    _
  $region11: #{bi_tempered_logistic_loss.1} parent=0 // loop_header
    %s81 = sphi 0, %s85
    %p82 = scmp.ge.s32.totalorder %s81, 4
    %v86 = vphi %v79, %v124
  $region12: #{bi_tempered_logistic_loss.1} parent=0 // loop_header_branch
    %84 = sbr.rel (%p82) target = $region16
  $region13: #{bi_tempered_logistic_loss.1} parent=0 // loop_body
    %v87 = vmul.f32 %v42, %v86
    %v88 = vmul.f32 %v43, %v86
    %v89 = vmul.f32 %v44, %v86
    %v90 = vmul.f32 %v45, %v86
    %v91 = vadd.f32 %v87, 1.0
    %v92 = vadd.f32 %v88, 1.0
    %v93 = vadd.f32 %v89, 1.0
    %v94 = vadd.f32 %v90, 1.0
    %v95 = vmax.f32 %v91, 0.0
    %v96 = vmax.f32 %v92, 0.0
    %v97 = vmax.f32 %v93, 0.0
    %v98 = vmax.f32 %v94, 0.0
    %v99 = vmul.f32 %v95, %v95
    %v100 = vmul.f32 %v96, %v96
    %v101 = vmul.f32 %v97, %v97
    %v102 = vmul.f32 %v98, %v98
    %v103 = vmul.f32 %v99, %v99
    %v104 = vmul.f32 %v100, %v100
    %v105 = vmul.f32 %v101, %v101
    %v106 = vmul.f32 %v102, %v102
    %v107 = vmul.f32 %v103, %v95
    %v108 = vmul.f32 %v104, %v96
    %v109 = vmul.f32 %v105, %v97
    %v110 = vmul.f32 %v106, %v98
    %v111 = vrcp.pop %v107
    %v112 = vrcp.pop %v108
    %v113 = vrcp.pop %v109
    %v114 = vrcp.pop %v110
    %v115 = vadd.f32 %v111, %v112
    %v116 = vadd.f32 %v115, %v113
    %v117 = vadd.f32 %v116, %v114
    %v118 = vrot.slane %v117, 4
    %v119 = vadd.f32 %v117, %v118
    %v120 = vrot.slane %v119, 2
    %v121 = vadd.f32 %v119, %v120
    %v122 = vrot.slane %v121, 1
    %v123 = vadd.f32 %v121, %v122
    %v124 = vpow.f32 %v123, -0.2
  $region14: #{bi_tempered_logistic_loss.1} parent=0 // loop_footer
    %s85 = sadd.s32 1, %s81
  $region15: #{bi_tempered_logistic_loss.1} parent=0 // loop_footer_branch
    %80 = sbr.rel target = $region11
  $region16: #{bi_tempered_logistic_loss.1} parent=0 // loop_exit
    _
  %v125 = vmul.f32 %v42, %v86
  %v126 = vmul.f32 %v43, %v86
  %v127 = vmul.f32 %v44, %v86
  %v128 = vmul.f32 %v45, %v86
  %v129 = vadd.f32 %v125, 1.0
  %v130 = vadd.f32 %v126, 1.0
  %v131 = vadd.f32 %v127, 1.0
  %v132 = vadd.f32 %v128, 1.0
  %v133 = vmax.f32 %v129, 0.0
  %v134 = vmax.f32 %v130, 0.0
  %v135 = vmax.f32 %v131, 0.0
  %v136 = vmax.f32 %v132, 0.0
  %v137 = vmul.f32 %v133, %v133
  %v138 = vmul.f32 %v134, %v134
  %v139 = vmul.f32 %v135, %v135
  %v140 = vmul.f32 %v136, %v136
  %v141 = vmul.f32 %v137, %v137
  %v142 = vmul.f32 %v138, %v138
  %v143 = vmul.f32 %v139, %v139
  %v144 = vmul.f32 %v140, %v140
  %v145 = vmul.f32 %v141, %v133
  %v146 = vmul.f32 %v142, %v134
  %v147 = vmul.f32 %v143, %v135
  %v148 = vmul.f32 %v144, %v136
  %v149 = vrcp.pop %v145
  %v150 = vrcp.pop %v146
  %v151 = vrcp.pop %v147
  %v152 = vrcp.pop %v148
  %v153 = vmul.f32 %v145, %v149
  %v154 = vmul.f32 %v146, %v150
  %v155 = vmul.f32 %v147, %v151
  %v156 = vmul.f32 %v148, %v152
  %v157 = vsub.f32 2.0, %v153
  %v158 = vsub.f32 2.0, %v154
  %v159 = vsub.f32 2.0, %v155
  %v160 = vsub.f32 2.0, %v156
  %v161 = vmul.f32 %v149, %v157
  %v162 = vmul.f32 %v150, %v158
  %v163 = vmul.f32 %v151, %v159
  %v164 = vmul.f32 %v152, %v160
  %v165 = vadd.f32 %v161, %v162
  %v166 = vadd.f32 %v165, %v163
  %v167 = vadd.f32 %v166, %v164
  %v168 = vrot.slane %v167, 4
  %v169 = vadd.f32 %v167, %v168
  %v170 = vrot.slane %v169, 2
  %v171 = vadd.f32 %v169, %v170
  %v172 = vrot.slane %v171, 1
  %v173 = vadd.f32 %v171, %v172
  %v174 = vpow.f32 %v173, 0.2
  %v175 = vadd.f32 %v42, %v174
  %v176 = vadd.f32 %v43, %v174
  %v177 = vadd.f32 %v44, %v174
  %v178 = vadd.f32 %v45, %v174
  %v179 = vmax.f32 %v175, 0.0
  %v180 = vmax.f32 %v176, 0.0
  %v181 = vmax.f32 %v177, 0.0
  %v182 = vmax.f32 %v178, 0.0
  %v183 = vmul.f32 %v179, %v179
  %v184 = vmul.f32 %v180, %v180
  %v185 = vmul.f32 %v181, %v181
  %v186 = vmul.f32 %v182, %v182
  %v187 = vmul.f32 %v183, %v183
  %v188 = vmul.f32 %v184, %v184
  %v189 = vmul.f32 %v185, %v185
  %v190 = vmul.f32 %v186, %v186
  %v191 = vmul.f32 %v187, %v179
  %v192 = vmul.f32 %v188, %v180
  %v193 = vmul.f32 %v189, %v181
  %v194 = vmul.f32 %v190, %v182
  %v195 = vrcp.pop %v191
  %v196 = vrcp.pop %v192
  %v197 = vrcp.pop %v193
  %v198 = vrcp.pop %v194
  %v199 = vmul.f32 %v191, %v195
  %v200 = vmul.f32 %v192, %v196
  %v201 = vmul.f32 %v193, %v197
  %v202 = vmul.f32 %v194, %v198
  %v203 = vsub.f32 2.0, %v199
  %v204 = vsub.f32 2.0, %v200
  %v205 = vsub.f32 2.0, %v201
  %v206 = vsub.f32 2.0, %v202
  %v207 = vmul.f32 %v195, %v203
  %v208 = vmul.f32 %v196, %v204
  %v209 = vmul.f32 %v197, %v205
  %v210 = vmul.f32 %v198, %v206
  %v211 = vmul.f32 %v207, %v179
  %v212 = vmul.f32 %v208, %v180
  %v213 = vmul.f32 %v209, %v181
  %v214 = vmul.f32 %v210, %v182
  %v215 = vsel %vm25, 0.9, 0.0032258064
  %v216 = vsel %vm26, 0.9, 0.0032258064
  %v217 = vsel %vm27, 0.9, 0.0032258064
  %v218 = vsel %vm28, 0.9, 0.0032258064
  %v219 = vsel %vm25, 0.5744788, 2.2760745e-05
  %v220 = vsel %vm26, 0.5744788, 2.2760745e-05
  %v221 = vsel %vm27, 0.5744788, 2.2760745e-05
  %v222 = vsel %vm28, 0.5744788, 2.2760745e-05
  %v223 = vmul.f32 %v207, 0.5555556
  %v224 = vmul.f32 %v208, 0.5555556
  %v225 = vmul.f32 %v209, 0.5555556
  %v226 = vmul.f32 %v210, 0.5555556
  %v227 = vmul.f32 %v215, 1.25
  %v228 = vmul.f32 %v216, 1.25
  %v229 = vmul.f32 %v217, 1.25
  %v230 = vmul.f32 %v218, 1.25
  %v231 = vsub.f32 %v223, %v227
  %v232 = vsub.f32 %v224, %v228
  %v233 = vsub.f32 %v225, %v229
  %v234 = vsub.f32 %v226, %v230
  %v235 = vmul.f32 %v211, %v231
  %v236 = vmul.f32 %v212, %v232
  %v237 = vmul.f32 %v213, %v233
  %v238 = vmul.f32 %v214, %v234
  %v239 = vadd.f32 %v219, %v235
  %v240 = vadd.f32 %v220, %v236
  %v241 = vadd.f32 %v221, %v237
  %v242 = vadd.f32 %v222, %v238
  %v243 = vadd.f32 %v239, %v240
  %v244 = vadd.f32 %v243, %v241
  %v245 = vadd.f32 %v244, %v242
  %v246 = vrot.slane %v245, 4
  %v247 = vadd.f32 %v245, %v246
  %v248 = vrot.slane %v247, 2
  %v249 = vadd.f32 %v247, %v248
  %v250 = vrot.slane %v249, 1
  %v251 = vadd.f32 %v249, %v250
  %252 = vst [vmem:[%s2] sm:$0x1] %v251
  // Predicated region
  $region17: #{bi_tempered_logistic_loss.1} parent=0 // pred_check
    _
  $region18: #{bi_tempered_logistic_loss.1} parent=0 // pred_check_branch
    %254 = sbr.rel (0) target = $region20
  $region19: #{bi_tempered_logistic_loss.1} parent=0 // pred_region
    _
  $region20: #{bi_tempered_logistic_loss.1} parent=0 // pred_fallthru
    _
  // Predicated region
  $region21: #{bi_tempered_logistic_loss.1} parent=0 // pred_check
    _
  $region22: #{bi_tempered_logistic_loss.1} parent=0 // pred_check_branch
    %256 = sbr.rel (0) target = $region24
  $region23: #{bi_tempered_logistic_loss.1} parent=0 // pred_region
    _
  $region24: #{bi_tempered_logistic_loss.1} parent=0 // pred_fallthru
    _

</llo_original>
